<compile_context>
chip_gen: v7x
topology: tpu7x:2x2x1
jax: 0.10.0
libtpu: 0.0.40
codegen_flags: <defaults>
</compile_context>

<pallas_src>
import math

import jax
import jax.numpy as jnp
from jax.experimental import pallas as pl
from jax.experimental.pallas import tpu as pltpu

LN_EPS = 1e-5       # torch.nn.LayerNorm default eps
NEG_SLOPE = 0.2     # torch.nn.LeakyReLU(0.2)


def _round_up(x, m):
    return (x + m - 1) // m * m


# ---------------------------------------------------------------------------
# Kernel bodies
# ---------------------------------------------------------------------------
def _fused_block(h, w_ref, p, width):
    """One (Linear -> LayerNorm -> LeakyReLU(0.2) -> Dropout[eval]) block.

    h:     [bm, in]  activation value (bf16 or f32; cast to bf16 for the MXU)
    w_ref: [in, out] bf16 weight Ref
    p:     [3, P]    f32 packed (linear bias, LN gamma, LN beta), P >= width
    """
    y = jnp.dot(h.astype(jnp.bfloat16), w_ref[...],
                preferred_element_type=jnp.float32)
    y = y + p[0:1, :width]                              # linear bias
    # One-pass LayerNorm: centered value reused for variance and normalize.
    mu = jnp.mean(y, axis=-1, keepdims=True)
    yc = y - mu
    var = jnp.mean(yc * yc, axis=-1, keepdims=True)
    yn = yc * jax.lax.rsqrt(var + LN_EPS)
    yn = yn * p[1:2, :width] + p[2:3, :width]           # gamma, beta
    # LeakyReLU(0.2); Dropout(0.2) is identity in eval mode.
    # TODO(synk): training-mode dropout (random mask) is not implemented.
    return jnp.maximum(yn, NEG_SLOPE * yn)


def _build_kernel(n_enc, n_dec, enc_out, dec_out, latent, encoder_only):
    """Full kernel args:  x, eps, enc_w*, ln_enc, w_head, b_head,
                          dec_w*, ln_dec, -> x_hat, [mean|logvar]
       Encoder-only args: x, enc_w*, ln_enc, w_head, b_head -> [mean|logvar]"""

    def kernel(*refs):
        pos = 0
        x_ref = refs[pos]; pos += 1
        if not encoder_only:
            eps_ref = refs[pos]; pos += 1
        enc_w = refs[pos:pos + n_enc]; pos += n_enc
        ln_enc_ref = refs[pos]; pos += 1
        w_head_ref = refs[pos]; pos += 1
        b_head_ref = refs[pos]; pos += 1
        if not encoder_only:
            dec_w = refs[pos:pos + n_dec]; pos += n_dec
            ln_dec_ref = refs[pos]; pos += 1
            xhat_ref = refs[pos]; pos += 1
        mv_ref = refs[pos]

        # ---- encoder blocks (all intermediates stay in vregs/VMEM) ----
        h = x_ref[...]
        for i in range(n_enc):
            h = _fused_block(h, enc_w[i], ln_enc_ref[i], enc_out[i])

        # ---- fused mean / log-var head: one (hidden, 2*latent) matmul ----
        mv = jnp.dot(h.astype(jnp.bfloat16), w_head_ref[...],
                     preferred_element_type=jnp.float32) + b_head_ref[...]
        mv_ref[...] = mv                                 # lane-dense [mean|logvar]

        if not encoder_only:
            mean = mv[:, :latent]
            logv = mv[:, latent:]
            # reparameterize: z = mean + exp(logvar / 2) * eps
            z = mean + jnp.exp(logv * 0.5) * eps_ref[...]
            d = z
            for i in range(n_dec):
                d = _fused_block(d, dec_w[i], ln_dec_ref[i], dec_out[i])
            xhat_ref[...] = d.astype(xhat_ref.dtype)

    return kernel


# ---------------------------------------------------------------------------
# Parameters (matches PyTorch shapes & init: xavier_normal_(gain=0.2), bias=0)
# ---------------------------------------------------------------------------
def make_condition_vae_params(layers, input_crop, key):
    full = [input_crop * 128] + list(layers)
    latent = full[-1]
    enc_in, enc_out = full[:-2], full[1:-1]
    n_enc = len(enc_out)
    rev = full[::-1]
    dec_in, dec_out = rev[:-1], rev[1:]
    n_dec = len(dec_out)

    keys = jax.random.split(key, n_enc + n_dec + 2)

    def xavier(k, fan_in, fan_out):
        std = 0.2 * math.sqrt(2.0 / (fan_in + fan_out))     # gain = 0.2
        # Stored (in, out) so the kernel computes x @ W (== x @ weight.T).
        w = jax.random.normal(k, (fan_in, fan_out), jnp.float32) * std
        return w.astype(jnp.bfloat16)

    def pack_ln(widths):
        # Per-layer [linear bias; LN gamma; LN beta], padded to a common lane
        # width -> one DMA'd operand per section instead of one per layer.
        P = _round_up(max(widths), 128)
        rows = []
        for w in widths:
            bias = jnp.zeros((P,), jnp.float32)
            gamma = jnp.pad(jnp.ones((w,), jnp.float32), (0, P - w))
            beta = jnp.zeros((P,), jnp.float32)
            rows.append(jnp.stack([bias, gamma, beta]))
        return jnp.stack(rows)                               # (n_layers, 3, P)

    enc_w = [xavier(keys[i], enc_in[i], enc_out[i]) for i in range(n_enc)]
    w_mean = xavier(keys[n_enc], full[-2], latent)
    w_var = xavier(keys[n_enc + 1], full[-2], latent)
    w_head = jnp.concatenate([w_mean, w_var], axis=1)        # fused head weight
    b_head = jnp.zeros((1, 2 * latent), jnp.float32)
    dec_w = [xavier(keys[n_enc + 2 + i], dec_in[i], dec_out[i])
             for i in range(n_dec)]

    return {
        "enc_w": enc_w, "ln_enc": pack_ln(enc_out), "enc_out": tuple(enc_out),
        "w_head": w_head, "b_head": b_head,
        "dec_w": dec_w, "ln_dec": pack_ln(dec_out), "dec_out": tuple(dec_out),
        "latent": latent, "d_in": full[0],
    }


# ---------------------------------------------------------------------------
# Forward pass (mirrors ConditionVAE.forward)
# ---------------------------------------------------------------------------
def _const_spec(arr):
    nd = arr.ndim
    return pl.BlockSpec(arr.shape, lambda i, _n=nd: (0,) * _n)


def _pick_bm(batch):
    """Batch tile: full batch for tiny B; otherwise big (<=512) tiles with at
    least 2 grid steps so ("parallel",) shards over v7x's two TensorCores."""
    if batch <= 16:
        return batch
    return min(512, _round_up(pl.cdiv(batch, 2), 8))


def condition_vae_forward(params, inp, input_crop, eps=None, encoder_only=False):
    inp = inp[:, :input_crop, :]                       # crop time steps
    B = inp.shape[0]
    # bf16 activation I/O; all LN/epilogue math is f32 inside the kernel.
    x = inp.reshape(B, -1).astype(jnp.bfloat16)
    d_in = x.shape[1]
    latent = params["latent"]
    n_enc, n_dec = len(params["enc_w"]), len(params["dec_w"])

    bm = _pick_bm(B)
    grid = (pl.cdiv(B, bm),)

    args, in_specs = [], []
    blk_bytes = 0

    def _add(arr, spec, block_shape):
        nonlocal blk_bytes
        args.append(arr)
        in_specs.append(spec)
        blk_bytes += math.prod(block_shape) * jnp.dtype(arr.dtype).itemsize

    _add(x, pl.BlockSpec((bm, d_in), lambda i: (i, 0)), (bm, d_in))
    if not encoder_only:
        if eps is None:
            raise ValueError("eps is required unless encoder_only=True")
        eps = eps.astype(jnp.float32)
        _add(eps, pl.BlockSpec((bm, latent), lambda i: (i, 0)), (bm, latent))
    for w in params["enc_w"]:
        _add(w, _const_spec(w), w.shape)
    _add(params["ln_enc"], _const_spec(params["ln_enc"]), params["ln_enc"].shape)
    _add(params["w_head"], _const_spec(params["w_head"]), params["w_head"].shape)
    _add(params["b_head"], _const_spec(params["b_head"]), params["b_head"].shape)
    if not encoder_only:
        for w in params["dec_w"]:
            _add(w, _const_spec(w), w.shape)
        _add(params["ln_dec"], _const_spec(params["ln_dec"]),
             params["ln_dec"].shape)

    out_shapes, out_specs = [], []
    if not encoder_only:
        out_shapes.append(jax.ShapeDtypeStruct((B, d_in), jnp.bfloat16))   # x_hat
        out_specs.append(pl.BlockSpec((bm, d_in), lambda i: (i, 0)))
        blk_bytes += bm * d_in * 2
    out_shapes.append(jax.ShapeDtypeStruct((B, 2 * latent), jnp.float32))  # [mean|logvar]
    out_specs.append(pl.BlockSpec((bm, 2 * latent), lambda i: (i, 0)))
    blk_bytes += bm * 2 * latent * 4

    # Every operand block is double-buffered by the BlockSpec pipeline; budget
    # VMEM explicitly (matters on v7x 64 MiB physical / v5e 16 MiB default).
    vmem_limit = int(min(64 << 20, max(32 << 20, 2 * blk_bytes + (4 << 20))))

    kernel = _build_kernel(n_enc, n_dec, params["enc_out"], params["dec_out"],
                           latent, encoder_only)
    outs = pl.pallas_call(
        kernel,
        grid=grid,
        out_shape=tuple(out_shapes),
        in_specs=in_specs,
        out_specs=tuple(out_specs),
        compiler_params=pltpu.CompilerParams(
            dimension_semantics=("parallel",),
            vmem_limit_bytes=vmem_limit),
    )(*args)

    if encoder_only:
        mv = outs[0]
        return mv[:, :latent], mv[:, latent:]

    x_hat_flat, mv = outs
    mean, var = mv[:, :latent], mv[:, latent:]
    x_hat = x_hat_flat.reshape(B, input_crop, 128)     # bf16 reconstruction
    return inp, x_hat, mean, var


# ---------------------------------------------------------------------------
# Demo
# ---------------------------------------------------------------------------
if __name__ == "__main__":
    key = jax.random.PRNGKey(0)
    k_input, k_params, k_eps = jax.random.split(key, 3)

    # Small shapes: batch=2, seq=4 (cropped to input_crop=2), codebook dim=128.
    B, T = 2, 4
    input_crop = 2
    layers = [64, 32, 16]   # latent dim = 16; full layer list = [256, 64, 32, 16]

    inp = jax.random.normal(k_input, (B, T, 128), jnp.float32)
    params = make_condition_vae_params(layers, input_crop, k_params)
    eps = jax.random.normal(k_eps, (B, layers[-1]), jnp.float32)  # randn_like(var)

    cropped, x_hat, mean, var = condition_vae_forward(params, inp, input_crop, eps)
    jax.block_until_ready((cropped, x_hat, mean, var))

    assert cropped.shape == (B, input_crop, 128)
    assert x_hat.shape == (B, input_crop, 128)
    assert mean.shape == (B, layers[-1])
    assert var.shape == (B, layers[-1])
    assert all(bool(jnp.isfinite(a.astype(jnp.float32)).all())
               for a in (cropped, x_hat, mean, var))

    # encoder_only path uses a dedicated decoder-free fused kernel.
    m2, v2 = condition_vae_forward(params, inp, input_crop, encoder_only=True)
    jax.block_until_ready((m2, v2))
    assert m2.shape == (B, layers[-1]) and v2.shape == (B, layers[-1])
    assert bool(jnp.allclose(m2, mean, atol=1e-5, rtol=1e-5))
    assert bool(jnp.allclose(v2, var, atol=1e-5, rtol=1e-5))

    print("KERNEL_OK")
</pallas_src>

<mosaic_0001>
module attributes {stable_mosaic.version = 11 : i64} {
  func.func @kernel(%arg0: i32, %arg1: memref<2x256xbf16, #tpu.memory_space<vmem>>, %arg2: memref<2x16xf32, #tpu.memory_space<vmem>>, %arg3: memref<256x64xbf16, #tpu.memory_space<vmem>>, %arg4: memref<64x32xbf16, #tpu.memory_space<vmem>>, %arg5: memref<2x3x128xf32, #tpu.memory_space<vmem>>, %arg6: memref<32x32xbf16, #tpu.memory_space<vmem>>, %arg7: memref<1x32xf32, #tpu.memory_space<vmem>>, %arg8: memref<16x32xbf16, #tpu.memory_space<vmem>>, %arg9: memref<32x64xbf16, #tpu.memory_space<vmem>>, %arg10: memref<64x256xbf16, #tpu.memory_space<vmem>>, %arg11: memref<3x3x256xf32, #tpu.memory_space<vmem>>, %arg12: memref<2x256xbf16, #tpu.memory_space<vmem>>, %arg13: memref<2x32xf32, #tpu.memory_space<vmem>>) attributes {dimension_semantics = [#tpu.dimension_semantics<parallel>], iteration_bounds = array<i64: 1>, scalar_prefetch = 0 : i64, scratch_operands = 0 : i64, tpu.core_type = #tpu.core_type<tc>, window_params = [{transform_indices = @transform_0, window_bounds = array<i64: 2, 256>}, {transform_indices = @transform_1, window_bounds = array<i64: 2, 16>}, {pipeline_mode = #tpu.pipeline_mode<synchronous>, transform_indices = @transform_2, window_bounds = array<i64: 256, 64>}, {pipeline_mode = #tpu.pipeline_mode<synchronous>, transform_indices = @transform_3, window_bounds = array<i64: 64, 32>}, {pipeline_mode = #tpu.pipeline_mode<synchronous>, transform_indices = @transform_4, window_bounds = array<i64: 2, 3, 128>}, {pipeline_mode = #tpu.pipeline_mode<synchronous>, transform_indices = @transform_5, window_bounds = array<i64: 32, 32>}, {pipeline_mode = #tpu.pipeline_mode<synchronous>, transform_indices = @transform_6, window_bounds = array<i64: 1, 32>}, {pipeline_mode = #tpu.pipeline_mode<synchronous>, transform_indices = @transform_7, window_bounds = array<i64: 16, 32>}, {pipeline_mode = #tpu.pipeline_mode<synchronous>, transform_indices = @transform_8, window_bounds = array<i64: 32, 64>}, {pipeline_mode = #tpu.pipeline_mode<synchronous>, transform_indices = @transform_9, window_bounds = array<i64: 64, 256>}, {pipeline_mode = #tpu.pipeline_mode<synchronous>, transform_indices = @transform_10, window_bounds = array<i64: 3, 3, 256>}, {transform_indices = @transform_11, window_bounds = array<i64: 2, 256>}, {transform_indices = @transform_12, window_bounds = array<i64: 2, 32>}]} {
    %c0 = arith.constant 0 : index
    %c0_0 = arith.constant 0 : index
    %0 = vector.load %arg1[%c0, %c0_0] : memref<2x256xbf16, #tpu.memory_space<vmem>>, vector<2x256xbf16>
    %c0_1 = arith.constant 0 : index
    %c0_2 = arith.constant 0 : index
    %c0_3 = arith.constant 0 : index
    %1 = vector.load %arg5[%c0_1, %c0_2, %c0_3] : memref<2x3x128xf32, #tpu.memory_space<vmem>>, vector<1x3x128xf32>
    %2 = vector.shape_cast %1 : vector<1x3x128xf32> to vector<3x128xf32>
    %c0_4 = arith.constant 0 : index
    %c0_5 = arith.constant 0 : index
    %3 = vector.load %arg3[%c0_4, %c0_5] : memref<256x64xbf16, #tpu.memory_space<vmem>>, vector<256x64xbf16>
    %cst = arith.constant dense<0.000000e+00> : vector<2x64xf32>
    %4 = tpu.matmul %0, %3, %cst {dimension_numbers = #tpu.dot_dimension_numbers<[1], [0], [0], [1], [0, 0, 1, 1], [], []>} : vector<2x256xbf16>, vector<256x64xbf16>, vector<2x64xf32> -> vector<2x64xf32>
    %5 = vector.extract_strided_slice %2 {offsets = [0, 0], sizes = [1, 64], strides = [1, 1]} : vector<3x128xf32> to vector<1x64xf32>
    %6 = vector.broadcast %5 : vector<1x64xf32> to vector<2x64xf32>
    %7 = arith.addf %4, %6 : vector<2x64xf32>
    %cst_6 = arith.constant dense<0.000000e+00> : vector<2xf32>
    %8 = vector.multi_reduction <add>, %7, %cst_6 [1] : vector<2x64xf32> to vector<2xf32>
    %9 = vector.shape_cast %8 : vector<2xf32> to vector<2x1xf32>
    %cst_7 = arith.constant 6.400000e+01 : f32
    %10 = vector.broadcast %cst_7 : f32 to vector<2x1xf32>
    %11 = arith.divf %9, %10 : vector<2x1xf32>
    %12 = vector.broadcast %11 : vector<2x1xf32> to vector<2x64xf32>
    %13 = arith.subf %7, %12 : vector<2x64xf32>
    %14 = arith.mulf %13, %13 : vector<2x64xf32>
    %cst_8 = arith.constant dense<0.000000e+00> : vector<2xf32>
    %15 = vector.multi_reduction <add>, %14, %cst_8 [1] : vector<2x64xf32> to vector<2xf32>
    %16 = vector.shape_cast %15 : vector<2xf32> to vector<2x1xf32>
    %cst_9 = arith.constant 6.400000e+01 : f32
    %17 = vector.broadcast %cst_9 : f32 to vector<2x1xf32>
    %18 = arith.divf %16, %17 : vector<2x1xf32>
    %cst_10 = arith.constant 9.99999974E-6 : f32
    %19 = vector.broadcast %cst_10 : f32 to vector<2x1xf32>
    %20 = arith.addf %18, %19 : vector<2x1xf32>
    %21 = math.rsqrt %20 : vector<2x1xf32>
    %22 = vector.broadcast %21 : vector<2x1xf32> to vector<2x64xf32>
    %23 = arith.mulf %13, %22 : vector<2x64xf32>
    %24 = vector.extract_strided_slice %2 {offsets = [1, 0], sizes = [1, 64], strides = [1, 1]} : vector<3x128xf32> to vector<1x64xf32>
    %25 = vector.broadcast %24 : vector<1x64xf32> to vector<2x64xf32>
    %26 = arith.mulf %23, %25 : vector<2x64xf32>
    %27 = vector.extract_strided_slice %2 {offsets = [2, 0], sizes = [1, 64], strides = [1, 1]} : vector<3x128xf32> to vector<1x64xf32>
    %28 = vector.broadcast %27 : vector<1x64xf32> to vector<2x64xf32>
    %29 = arith.addf %26, %28 : vector<2x64xf32>
    %cst_11 = arith.constant 2.000000e-01 : f32
    %30 = vector.broadcast %cst_11 : f32 to vector<2x64xf32>
    %31 = arith.mulf %30, %29 : vector<2x64xf32>
    %32 = arith.maximumf %29, %31 : vector<2x64xf32>
    %c1 = arith.constant 1 : index
    %c0_12 = arith.constant 0 : index
    %c0_13 = arith.constant 0 : index
    %33 = vector.load %arg5[%c1, %c0_12, %c0_13] : memref<2x3x128xf32, #tpu.memory_space<vmem>>, vector<1x3x128xf32>
    %34 = vector.shape_cast %33 : vector<1x3x128xf32> to vector<3x128xf32>
    %35 = arith.truncf %32 : vector<2x64xf32> to vector<2x64xbf16>
    %c0_14 = arith.constant 0 : index
    %c0_15 = arith.constant 0 : index
    %36 = vector.load %arg4[%c0_14, %c0_15] : memref<64x32xbf16, #tpu.memory_space<vmem>>, vector<64x32xbf16>
    %cst_16 = arith.constant dense<0.000000e+00> : vector<2x32xf32>
    %37 = tpu.matmul %35, %36, %cst_16 {dimension_numbers = #tpu.dot_dimension_numbers<[1], [0], [0], [1], [0, 0, 1, 1], [], []>} : vector<2x64xbf16>, vector<64x32xbf16>, vector<2x32xf32> -> vector<2x32xf32>
    %38 = vector.extract_strided_slice %34 {offsets = [0, 0], sizes = [1, 32], strides = [1, 1]} : vector<3x128xf32> to vector<1x32xf32>
    %39 = vector.broadcast %38 : vector<1x32xf32> to vector<2x32xf32>
    %40 = arith.addf %37, %39 : vector<2x32xf32>
    %cst_17 = arith.constant dense<0.000000e+00> : vector<2xf32>
    %41 = vector.multi_reduction <add>, %40, %cst_17 [1] : vector<2x32xf32> to vector<2xf32>
    %42 = vector.shape_cast %41 : vector<2xf32> to vector<2x1xf32>
    %cst_18 = arith.constant 3.200000e+01 : f32
    %43 = vector.broadcast %cst_18 : f32 to vector<2x1xf32>
    %44 = arith.divf %42, %43 : vector<2x1xf32>
    %45 = vector.broadcast %44 : vector<2x1xf32> to vector<2x32xf32>
    %46 = arith.subf %40, %45 : vector<2x32xf32>
    %47 = arith.mulf %46, %46 : vector<2x32xf32>
    %cst_19 = arith.constant dense<0.000000e+00> : vector<2xf32>
    %48 = vector.multi_reduction <add>, %47, %cst_19 [1] : vector<2x32xf32> to vector<2xf32>
    %49 = vector.shape_cast %48 : vector<2xf32> to vector<2x1xf32>
    %cst_20 = arith.constant 3.200000e+01 : f32
    %50 = vector.broadcast %cst_20 : f32 to vector<2x1xf32>
    %51 = arith.divf %49, %50 : vector<2x1xf32>
    %cst_21 = arith.constant 9.99999974E-6 : f32
    %52 = vector.broadcast %cst_21 : f32 to vector<2x1xf32>
    %53 = arith.addf %51, %52 : vector<2x1xf32>
    %54 = math.rsqrt %53 : vector<2x1xf32>
    %55 = vector.broadcast %54 : vector<2x1xf32> to vector<2x32xf32>
    %56 = arith.mulf %46, %55 : vector<2x32xf32>
    %57 = vector.extract_strided_slice %34 {offsets = [1, 0], sizes = [1, 32], strides = [1, 1]} : vector<3x128xf32> to vector<1x32xf32>
    %58 = vector.broadcast %57 : vector<1x32xf32> to vector<2x32xf32>
    %59 = arith.mulf %56, %58 : vector<2x32xf32>
    %60 = vector.extract_strided_slice %34 {offsets = [2, 0], sizes = [1, 32], strides = [1, 1]} : vector<3x128xf32> to vector<1x32xf32>
    %61 = vector.broadcast %60 : vector<1x32xf32> to vector<2x32xf32>
    %62 = arith.addf %59, %61 : vector<2x32xf32>
    %cst_22 = arith.constant 2.000000e-01 : f32
    %63 = vector.broadcast %cst_22 : f32 to vector<2x32xf32>
    %64 = arith.mulf %63, %62 : vector<2x32xf32>
    %65 = arith.maximumf %62, %64 : vector<2x32xf32>
    %66 = arith.truncf %65 : vector<2x32xf32> to vector<2x32xbf16>
    %c0_23 = arith.constant 0 : index
    %c0_24 = arith.constant 0 : index
    %67 = vector.load %arg6[%c0_23, %c0_24] : memref<32x32xbf16, #tpu.memory_space<vmem>>, vector<32x32xbf16>
    %cst_25 = arith.constant dense<0.000000e+00> : vector<2x32xf32>
    %68 = tpu.matmul %66, %67, %cst_25 {dimension_numbers = #tpu.dot_dimension_numbers<[1], [0], [0], [1], [0, 0, 1, 1], [], []>} : vector<2x32xbf16>, vector<32x32xbf16>, vector<2x32xf32> -> vector<2x32xf32>
    %c0_26 = arith.constant 0 : index
    %c0_27 = arith.constant 0 : index
    %69 = vector.load %arg7[%c0_26, %c0_27] : memref<1x32xf32, #tpu.memory_space<vmem>>, vector<1x32xf32>
    %70 = vector.broadcast %69 : vector<1x32xf32> to vector<2x32xf32>
    %71 = arith.addf %68, %70 : vector<2x32xf32>
    %c0_28 = arith.constant 0 : index
    %c0_29 = arith.constant 0 : index
    %72 = vector.load %arg13[%c0_28, %c0_29] : memref<2x32xf32, #tpu.memory_space<vmem>>, vector<2x32xf32>
    tpu.vector_store %arg13[%c0_28, %c0_29], %71 {strides = array<i32>} : memref<2x32xf32, #tpu.memory_space<vmem>>, vector<2x32xf32>,
    %73 = vector.extract_strided_slice %71 {offsets = [0, 0], sizes = [2, 16], strides = [1, 1]} : vector<2x32xf32> to vector<2x16xf32>
    %74 = vector.extract_strided_slice %71 {offsets = [0, 16], sizes = [2, 16], strides = [1, 1]} : vector<2x32xf32> to vector<2x16xf32>
    %cst_30 = arith.constant 5.000000e-01 : f32
    %75 = vector.broadcast %cst_30 : f32 to vector<2x16xf32>
    %76 = arith.mulf %74, %75 : vector<2x16xf32>
    %77 = math.exp %76 : vector<2x16xf32>
    %c0_31 = arith.constant 0 : index
    %c0_32 = arith.constant 0 : index
    %78 = vector.load %arg2[%c0_31, %c0_32] : memref<2x16xf32, #tpu.memory_space<vmem>>, vector<2x16xf32>
    %79 = arith.mulf %77, %78 : vector<2x16xf32>
    %80 = arith.addf %73, %79 : vector<2x16xf32>
    %c0_33 = arith.constant 0 : index
    %c0_34 = arith.constant 0 : index
    %c0_35 = arith.constant 0 : index
    %81 = vector.load %arg11[%c0_33, %c0_34, %c0_35] : memref<3x3x256xf32, #tpu.memory_space<vmem>>, vector<1x3x256xf32>
    %82 = vector.shape_cast %81 : vector<1x3x256xf32> to vector<3x256xf32>
    %83 = arith.truncf %80 : vector<2x16xf32> to vector<2x16xbf16>
    %c0_36 = arith.constant 0 : index
    %c0_37 = arith.constant 0 : index
    %84 = vector.load %arg8[%c0_36, %c0_37] : memref<16x32xbf16, #tpu.memory_space<vmem>>, vector<16x32xbf16>
    %cst_38 = arith.constant dense<0.000000e+00> : vector<2x32xf32>
    %85 = tpu.matmul %83, %84, %cst_38 {dimension_numbers = #tpu.dot_dimension_numbers<[1], [0], [0], [1], [0, 0, 1, 1], [], []>} : vector<2x16xbf16>, vector<16x32xbf16>, vector<2x32xf32> -> vector<2x32xf32>
    %86 = vector.extract_strided_slice %82 {offsets = [0, 0], sizes = [1, 32], strides = [1, 1]} : vector<3x256xf32> to vector<1x32xf32>
    %87 = vector.broadcast %86 : vector<1x32xf32> to vector<2x32xf32>
    %88 = arith.addf %85, %87 : vector<2x32xf32>
    %cst_39 = arith.constant dense<0.000000e+00> : vector<2xf32>
    %89 = vector.multi_reduction <add>, %88, %cst_39 [1] : vector<2x32xf32> to vector<2xf32>
    %90 = vector.shape_cast %89 : vector<2xf32> to vector<2x1xf32>
    %cst_40 = arith.constant 3.200000e+01 : f32
    %91 = vector.broadcast %cst_40 : f32 to vector<2x1xf32>
    %92 = arith.divf %90, %91 : vector<2x1xf32>
    %93 = vector.broadcast %92 : vector<2x1xf32> to vector<2x32xf32>
    %94 = arith.subf %88, %93 : vector<2x32xf32>
    %95 = arith.mulf %94, %94 : vector<2x32xf32>
    %cst_41 = arith.constant dense<0.000000e+00> : vector<2xf32>
    %96 = vector.multi_reduction <add>, %95, %cst_41 [1] : vector<2x32xf32> to vector<2xf32>
    %97 = vector.shape_cast %96 : vector<2xf32> to vector<2x1xf32>
    %cst_42 = arith.constant 3.200000e+01 : f32
    %98 = vector.broadcast %cst_42 : f32 to vector<2x1xf32>
    %99 = arith.divf %97, %98 : vector<2x1xf32>
    %cst_43 = arith.constant 9.99999974E-6 : f32
    %100 = vector.broadcast %cst_43 : f32 to vector<2x1xf32>
    %101 = arith.addf %99, %100 : vector<2x1xf32>
    %102 = math.rsqrt %101 : vector<2x1xf32>
    %103 = vector.broadcast %102 : vector<2x1xf32> to vector<2x32xf32>
    %104 = arith.mulf %94, %103 : vector<2x32xf32>
    %105 = vector.extract_strided_slice %82 {offsets = [1, 0], sizes = [1, 32], strides = [1, 1]} : vector<3x256xf32> to vector<1x32xf32>
    %106 = vector.broadcast %105 : vector<1x32xf32> to vector<2x32xf32>
    %107 = arith.mulf %104, %106 : vector<2x32xf32>
    %108 = vector.extract_strided_slice %82 {offsets = [2, 0], sizes = [1, 32], strides = [1, 1]} : vector<3x256xf32> to vector<1x32xf32>
    %109 = vector.broadcast %108 : vector<1x32xf32> to vector<2x32xf32>
    %110 = arith.addf %107, %109 : vector<2x32xf32>
    %cst_44 = arith.constant 2.000000e-01 : f32
    %111 = vector.broadcast %cst_44 : f32 to vector<2x32xf32>
    %112 = arith.mulf %111, %110 : vector<2x32xf32>
    %113 = arith.maximumf %110, %112 : vector<2x32xf32>
    %c1_45 = arith.constant 1 : index
    %c0_46 = arith.constant 0 : index
    %c0_47 = arith.constant 0 : index
    %114 = vector.load %arg11[%c1_45, %c0_46, %c0_47] : memref<3x3x256xf32, #tpu.memory_space<vmem>>, vector<1x3x256xf32>
    %115 = vector.shape_cast %114 : vector<1x3x256xf32> to vector<3x256xf32>
    %116 = arith.truncf %113 : vector<2x32xf32> to vector<2x32xbf16>
    %c0_48 = arith.constant 0 : index
    %c0_49 = arith.constant 0 : index
    %117 = vector.load %arg9[%c0_48, %c0_49] : memref<32x64xbf16, #tpu.memory_space<vmem>>, vector<32x64xbf16>
    %cst_50 = arith.constant dense<0.000000e+00> : vector<2x64xf32>
    %118 = tpu.matmul %116, %117, %cst_50 {dimension_numbers = #tpu.dot_dimension_numbers<[1], [0], [0], [1], [0, 0, 1, 1], [], []>} : vector<2x32xbf16>, vector<32x64xbf16>, vector<2x64xf32> -> vector<2x64xf32>
    %119 = vector.extract_strided_slice %115 {offsets = [0, 0], sizes = [1, 64], strides = [1, 1]} : vector<3x256xf32> to vector<1x64xf32>
    %120 = vector.broadcast %119 : vector<1x64xf32> to vector<2x64xf32>
    %121 = arith.addf %118, %120 : vector<2x64xf32>
    %cst_51 = arith.constant dense<0.000000e+00> : vector<2xf32>
    %122 = vector.multi_reduction <add>, %121, %cst_51 [1] : vector<2x64xf32> to vector<2xf32>
    %123 = vector.shape_cast %122 : vector<2xf32> to vector<2x1xf32>
    %cst_52 = arith.constant 6.400000e+01 : f32
    %124 = vector.broadcast %cst_52 : f32 to vector<2x1xf32>
    %125 = arith.divf %123, %124 : vector<2x1xf32>
    %126 = vector.broadcast %125 : vector<2x1xf32> to vector<2x64xf32>
    %127 = arith.subf %121, %126 : vector<2x64xf32>
    %128 = arith.mulf %127, %127 : vector<2x64xf32>
    %cst_53 = arith.constant dense<0.000000e+00> : vector<2xf32>
    %129 = vector.multi_reduction <add>, %128, %cst_53 [1] : vector<2x64xf32> to vector<2xf32>
    %130 = vector.shape_cast %129 : vector<2xf32> to vector<2x1xf32>
    %cst_54 = arith.constant 6.400000e+01 : f32
    %131 = vector.broadcast %cst_54 : f32 to vector<2x1xf32>
    %132 = arith.divf %130, %131 : vector<2x1xf32>
    %cst_55 = arith.constant 9.99999974E-6 : f32
    %133 = vector.broadcast %cst_55 : f32 to vector<2x1xf32>
    %134 = arith.addf %132, %133 : vector<2x1xf32>
    %135 = math.rsqrt %134 : vector<2x1xf32>
    %136 = vector.broadcast %135 : vector<2x1xf32> to vector<2x64xf32>
    %137 = arith.mulf %127, %136 : vector<2x64xf32>
    %138 = vector.extract_strided_slice %115 {offsets = [1, 0], sizes = [1, 64], strides = [1, 1]} : vector<3x256xf32> to vector<1x64xf32>
    %139 = vector.broadcast %138 : vector<1x64xf32> to vector<2x64xf32>
    %140 = arith.mulf %137, %139 : vector<2x64xf32>
    %141 = vector.extract_strided_slice %115 {offsets = [2, 0], sizes = [1, 64], strides = [1, 1]} : vector<3x256xf32> to vector<1x64xf32>
    %142 = vector.broadcast %141 : vector<1x64xf32> to vector<2x64xf32>
    %143 = arith.addf %140, %142 : vector<2x64xf32>
    %cst_56 = arith.constant 2.000000e-01 : f32
    %144 = vector.broadcast %cst_56 : f32 to vector<2x64xf32>
    %145 = arith.mulf %144, %143 : vector<2x64xf32>
    %146 = arith.maximumf %143, %145 : vector<2x64xf32>
    %c2 = arith.constant 2 : index
    %c0_57 = arith.constant 0 : index
    %c0_58 = arith.constant 0 : index
    %147 = vector.load %arg11[%c2, %c0_57, %c0_58] : memref<3x3x256xf32, #tpu.memory_space<vmem>>, vector<1x3x256xf32>
    %148 = vector.shape_cast %147 : vector<1x3x256xf32> to vector<3x256xf32>
    %149 = arith.truncf %146 : vector<2x64xf32> to vector<2x64xbf16>
    %c0_59 = arith.constant 0 : index
    %c0_60 = arith.constant 0 : index
    %150 = vector.load %arg10[%c0_59, %c0_60] : memref<64x256xbf16, #tpu.memory_space<vmem>>, vector<64x256xbf16>
    %cst_61 = arith.constant dense<0.000000e+00> : vector<2x256xf32>
    %151 = tpu.matmul %149, %150, %cst_61 {dimension_numbers = #tpu.dot_dimension_numbers<[1], [0], [0], [1], [0, 0, 1, 1], [], []>} : vector<2x64xbf16>, vector<64x256xbf16>, vector<2x256xf32> -> vector<2x256xf32>
    %152 = vector.extract_strided_slice %148 {offsets = [0, 0], sizes = [1, 256], strides = [1, 1]} : vector<3x256xf32> to vector<1x256xf32>
    %153 = vector.broadcast %152 : vector<1x256xf32> to vector<2x256xf32>
    %154 = arith.addf %151, %153 : vector<2x256xf32>
    %cst_62 = arith.constant dense<0.000000e+00> : vector<2xf32>
    %155 = vector.multi_reduction <add>, %154, %cst_62 [1] : vector<2x256xf32> to vector<2xf32>
    %156 = vector.shape_cast %155 : vector<2xf32> to vector<2x1xf32>
    %cst_63 = arith.constant 2.560000e+02 : f32
    %157 = vector.broadcast %cst_63 : f32 to vector<2x1xf32>
    %158 = arith.divf %156, %157 : vector<2x1xf32>
    %159 = vector.broadcast %158 : vector<2x1xf32> to vector<2x256xf32>
    %160 = arith.subf %154, %159 : vector<2x256xf32>
    %161 = arith.mulf %160, %160 : vector<2x256xf32>
    %cst_64 = arith.constant dense<0.000000e+00> : vector<2xf32>
    %162 = vector.multi_reduction <add>, %161, %cst_64 [1] : vector<2x256xf32> to vector<2xf32>
    %163 = vector.shape_cast %162 : vector<2xf32> to vector<2x1xf32>
    %cst_65 = arith.constant 2.560000e+02 : f32
    %164 = vector.broadcast %cst_65 : f32 to vector<2x1xf32>
    %165 = arith.divf %163, %164 : vector<2x1xf32>
    %cst_66 = arith.constant 9.99999974E-6 : f32
    %166 = vector.broadcast %cst_66 : f32 to vector<2x1xf32>
    %167 = arith.addf %165, %166 : vector<2x1xf32>
    %168 = math.rsqrt %167 : vector<2x1xf32>
    %169 = vector.broadcast %168 : vector<2x1xf32> to vector<2x256xf32>
    %170 = arith.mulf %160, %169 : vector<2x256xf32>
    %171 = vector.extract_strided_slice %148 {offsets = [1, 0], sizes = [1, 256], strides = [1, 1]} : vector<3x256xf32> to vector<1x256xf32>
    %172 = vector.broadcast %171 : vector<1x256xf32> to vector<2x256xf32>
    %173 = arith.mulf %170, %172 : vector<2x256xf32>
    %174 = vector.extract_strided_slice %148 {offsets = [2, 0], sizes = [1, 256], strides = [1, 1]} : vector<3x256xf32> to vector<1x256xf32>
    %175 = vector.broadcast %174 : vector<1x256xf32> to vector<2x256xf32>
    %176 = arith.addf %173, %175 : vector<2x256xf32>
    %cst_67 = arith.constant 2.000000e-01 : f32
    %177 = vector.broadcast %cst_67 : f32 to vector<2x256xf32>
    %178 = arith.mulf %177, %176 : vector<2x256xf32>
    %179 = arith.maximumf %176, %178 : vector<2x256xf32>
    %180 = arith.truncf %179 : vector<2x256xf32> to vector<2x256xbf16>
    %c0_68 = arith.constant 0 : index
    %c0_69 = arith.constant 0 : index
    %181 = vector.load %arg12[%c0_68, %c0_69] : memref<2x256xbf16, #tpu.memory_space<vmem>>, vector<2x256xbf16>
    tpu.vector_store %arg12[%c0_68, %c0_69], %180 {strides = array<i32>} : memref<2x256xbf16, #tpu.memory_space<vmem>>, vector<2x256xbf16>,
    return
  }
  func.func @transform_0(%arg0: i32) -> (i32, i32) {
    %c0_i32 = arith.constant 0 : i32
    %c0_i32_0 = arith.constant 0 : i32
    return %arg0, %c0_i32 : i32, i32
  }
  func.func @transform_1(%arg0: i32) -> (i32, i32) {
    %c0_i32 = arith.constant 0 : i32
    %c0_i32_0 = arith.constant 0 : i32
    return %arg0, %c0_i32 : i32, i32
  }
  func.func @transform_2(%arg0: i32) -> (i32, i32) {
    %c0_i32 = arith.constant 0 : i32
    %c0_i32_0 = arith.constant 0 : i32
    %c0_i32_1 = arith.constant 0 : i32
    return %c0_i32, %c0_i32_0 : i32, i32
  }
  func.func @transform_3(%arg0: i32) -> (i32, i32) {
    %c0_i32 = arith.constant 0 : i32
    %c0_i32_0 = arith.constant 0 : i32
    %c0_i32_1 = arith.constant 0 : i32
    return %c0_i32, %c0_i32_0 : i32, i32
  }
  func.func @transform_4(%arg0: i32) -> (i32, i32, i32) {
    %c0_i32 = arith.constant 0 : i32
    %c0_i32_0 = arith.constant 0 : i32
    %c0_i32_1 = arith.constant 0 : i32
    %c0_i32_2 = arith.constant 0 : i32
    return %c0_i32, %c0_i32_0, %c0_i32_1 : i32, i32, i32
  }
  func.func @transform_5(%arg0: i32) -> (i32, i32) {
    %c0_i32 = arith.constant 0 : i32
    %c0_i32_0 = arith.constant 0 : i32
    %c0_i32_1 = arith.constant 0 : i32
    return %c0_i32, %c0_i32_0 : i32, i32
  }
  func.func @transform_6(%arg0: i32) -> (i32, i32) {
    %c0_i32 = arith.constant 0 : i32
    %c0_i32_0 = arith.constant 0 : i32
    %c0_i32_1 = arith.constant 0 : i32
    return %c0_i32, %c0_i32_0 : i32, i32
  }
  func.func @transform_7(%arg0: i32) -> (i32, i32) {
    %c0_i32 = arith.constant 0 : i32
    %c0_i32_0 = arith.constant 0 : i32
    %c0_i32_1 = arith.constant 0 : i32
    return %c0_i32, %c0_i32_0 : i32, i32
  }
  func.func @transform_8(%arg0: i32) -> (i32, i32) {
    %c0_i32 = arith.constant 0 : i32
    %c0_i32_0 = arith.constant 0 : i32
    %c0_i32_1 = arith.constant 0 : i32
    return %c0_i32, %c0_i32_0 : i32, i32
  }
  func.func @transform_9(%arg0: i32) -> (i32, i32) {
    %c0_i32 = arith.constant 0 : i32
    %c0_i32_0 = arith.constant 0 : i32
    %c0_i32_1 = arith.constant 0 : i32
    return %c0_i32, %c0_i32_0 : i32, i32
  }
  func.func @transform_10(%arg0: i32) -> (i32, i32, i32) {
    %c0_i32 = arith.constant 0 : i32
    %c0_i32_0 = arith.constant 0 : i32
    %c0_i32_1 = arith.constant 0 : i32
    %c0_i32_2 = arith.constant 0 : i32
    return %c0_i32, %c0_i32_0, %c0_i32_1 : i32, i32, i32
  }
  func.func @transform_11(%arg0: i32) -> (i32, i32) {
    %c0_i32 = arith.constant 0 : i32
    %c0_i32_0 = arith.constant 0 : i32
    return %arg0, %c0_i32 : i32, i32
  }
  func.func @transform_12(%arg0: i32) -> (i32, i32) {
    %c0_i32 = arith.constant 0 : i32
    %c0_i32_0 = arith.constant 0 : i32
    return %arg0, %c0_i32 : i32, i32
  }
}

</mosaic_0001>

<llo_original>
// kernel: tpu_custom_call.1
$region0: #{tpu_custom_call.1}
  #allocation0 [shape = 'u32[]', space=smem, size = 0x4, offset = 0x4, fixed_abs, tag = 'smem constant byte address 0x4 - core index']
  #allocation1 [shape = 'u32[144,128]{1,0:T(1,128)}', space=vmem, size = 0x12000, scoped, tag = 'internal scratch']
  %s0 = inlined_call_operand.vmem [shape: bf16[2,256], index: 0, kind: input, shape index: {}]
  %s1 = inlined_call_operand.vmem [shape: f32[2,16], index: 1, kind: input, shape index: {}]
  %s2 = inlined_call_operand.vmem [shape: bf16[256,64], index: 2, kind: input, shape index: {}]
  %s3 = inlined_call_operand.vmem [shape: bf16[64,32], index: 3, kind: input, shape index: {}]
  %s4 = inlined_call_operand.vmem [shape: f32[2,3,128], index: 4, kind: input, shape index: {}]
  %s5 = inlined_call_operand.vmem [shape: bf16[32,32], index: 5, kind: input, shape index: {}]
  %s6 = inlined_call_operand.vmem [shape: f32[1,32], index: 6, kind: input, shape index: {}]
  %s7 = inlined_call_operand.vmem [shape: bf16[16,32], index: 7, kind: input, shape index: {}]
  %s8 = inlined_call_operand.vmem [shape: bf16[32,64], index: 8, kind: input, shape index: {}]
  %s9 = inlined_call_operand.vmem [shape: bf16[64,256], index: 9, kind: input, shape index: {}]
  %s10 = inlined_call_operand.vmem [shape: f32[3,3,256], index: 10, kind: input, shape index: {}]
  %s11 = inlined_call_operand.hbm [shape: bf16[2,256], index: 11, kind: output, shape index: {0}]
  %s12 = inlined_call_operand.hbm [shape: f32[2,32], index: 12, kind: output, shape index: {1}]
  %13 = xla_tuple %s11, %s12
  %s14 = sld [smem:[#allocation0]]
  $region62: #{tpu_custom_call.1} parent=0
    _
  %s16 = ssub.s32 1, %s14
  %s17 = scalar_select 0, %s16, %s14
  $region1: #{tpu_custom_call.1} parent=0
    #allocation2 [shape = 'u8[1024]{0}', space=vmem, size = 0x400, scoped, tag = 'output window, operand 0, single buffered']
    #allocation3 [shape = 's32[1]{0}', space=sflag, size = 0x4, scoped, tag = 'scoped memory for tpu_custom_call.1']
    #allocation4 [shape = 'u8[1024]{0}', space=vmem, size = 0x400, scoped, tag = 'output window, operand 1, single buffered']
    #allocation5 [shape = 's32[1]{0}', space=sflag, size = 0x4, scoped, tag = 'scoped memory for tpu_custom_call.1']
    %18 = vsyncpa [#allocation3], 0
    %19 = vsyncpa [#allocation5], 0
    // Predicated region
    $region2: #{tpu_custom_call.1} parent=1 // pred_check
      _
    $region3: #{tpu_custom_call.1} parent=1 // pred_check_branch
      %21 = sbr.rel (0) target = $region5
    $region4: #{tpu_custom_call.1} parent=1 // pred_region
      _
    $region5: #{tpu_custom_call.1} parent=1 // pred_fallthru
      _
    // Predicated region
    $region6: #{tpu_custom_call.1} parent=1 // pred_check
      _
    $region7: #{tpu_custom_call.1} parent=1 // pred_check_branch
      %23 = sbr.rel (0) target = $region9
    $region8: #{tpu_custom_call.1} parent=1 // pred_region
      _
    $region9: #{tpu_custom_call.1} parent=1 // pred_fallthru
      _
    // Predicated region
    $region10: #{tpu_custom_call.1} parent=1 // pred_check
      _
    $region11: #{tpu_custom_call.1} parent=1 // pred_check_branch
      %25 = sbr.rel (0) target = $region13
    $region12: #{tpu_custom_call.1} parent=1 // pred_region
      _
    $region13: #{tpu_custom_call.1} parent=1 // pred_fallthru
      _
    // Predicated region
    $region14: #{tpu_custom_call.1} parent=1 // pred_check
      _
    $region15: #{tpu_custom_call.1} parent=1 // pred_check_branch
      %27 = sbr.rel (0) target = $region17
    $region16: #{tpu_custom_call.1} parent=1 // pred_region
      _
    $region17: #{tpu_custom_call.1} parent=1 // pred_fallthru
      _
    // Predicated region
    $region18: #{tpu_custom_call.1} parent=1 // pred_check
      _
    $region19: #{tpu_custom_call.1} parent=1 // pred_check_branch
      %29 = sbr.rel (0) target = $region21
    $region20: #{tpu_custom_call.1} parent=1 // pred_region
      _
    $region21: #{tpu_custom_call.1} parent=1 // pred_fallthru
      _
    // Predicated region
    $region22: #{tpu_custom_call.1} parent=1 // pred_check
      _
    $region23: #{tpu_custom_call.1} parent=1 // pred_check_branch
      %31 = sbr.rel (0) target = $region25
    $region24: #{tpu_custom_call.1} parent=1 // pred_region
      _
    $region25: #{tpu_custom_call.1} parent=1 // pred_fallthru
      _
    // Predicated region
    $region26: #{tpu_custom_call.1} parent=1 // pred_check
      _
    $region27: #{tpu_custom_call.1} parent=1 // pred_check_branch
      %33 = sbr.rel (0) target = $region29
    $region28: #{tpu_custom_call.1} parent=1 // pred_region
      _
    $region29: #{tpu_custom_call.1} parent=1 // pred_fallthru
      _
    // Predicated region
    $region30: #{tpu_custom_call.1} parent=1 // pred_check
      _
    $region31: #{tpu_custom_call.1} parent=1 // pred_check_branch
      %35 = sbr.rel (0) target = $region33
    $region32: #{tpu_custom_call.1} parent=1 // pred_region
      _
    $region33: #{tpu_custom_call.1} parent=1 // pred_fallthru
      _
    // Predicated region
    $region34: #{tpu_custom_call.1} parent=1 // pred_check
      _
    $region35: #{tpu_custom_call.1} parent=1 // pred_check_branch
      %37 = sbr.rel (0) target = $region37
    $region36: #{tpu_custom_call.1} parent=1 // pred_region
      _
    $region37: #{tpu_custom_call.1} parent=1 // pred_fallthru
      _
    // Predicated region
    $region38: #{tpu_custom_call.1} parent=1 // pred_check
      _
    $region39: #{tpu_custom_call.1} parent=1 // pred_check_branch
      %39 = sbr.rel (0) target = $region41
    $region40: #{tpu_custom_call.1} parent=1 // pred_region
      _
    $region41: #{tpu_custom_call.1} parent=1 // pred_fallthru
      _
    // Predicated region
    $region42: #{tpu_custom_call.1} parent=1 // pred_check
      _
    $region43: #{tpu_custom_call.1} parent=1 // pred_check_branch
      %41 = sbr.rel (0) target = $region45
    $region44: #{tpu_custom_call.1} parent=1 // pred_region
      _
    $region45: #{tpu_custom_call.1} parent=1 // pred_fallthru
      _
    %v43 = vld [vmem:[%s0] sm:$0x3]
    %v44 = vld [vmem:[%s4] sm:$0x7]
    %v45 = vld [vmem:[%s2] sm:$0xf]
    %v46 = vld [vmem:[%s2 + $0x4] sm:$0xf]
    %v47 = vld [vmem:[%s2 + $0x8] sm:$0xf]
    %v48 = vld [vmem:[%s2 + $0xc] sm:$0xf]
    %v49 = vld [vmem:[%s2 + $0x10] sm:$0xf]
    %v50 = vld [vmem:[%s2 + $0x14] sm:$0xf]
    %v51 = vld [vmem:[%s2 + $0x18] sm:$0xf]
    %v52 = vld [vmem:[%s2 + $0x1c] sm:$0xf]
    %v53 = vld [vmem:[%s2 + $0x20] sm:$0xf]
    %v54 = vld [vmem:[%s2 + $0x24] sm:$0xf]
    %v55 = vld [vmem:[%s2 + $0x28] sm:$0xf]
    %v56 = vld [vmem:[%s2 + $0x2c] sm:$0xf]
    %v57 = vld [vmem:[%s2 + $0x30] sm:$0xf]
    %v58 = vld [vmem:[%s2 + $0x34] sm:$0xf]
    %v59 = vld [vmem:[%s2 + $0x38] sm:$0xf]
    %v60 = vld [vmem:[%s2 + $0x3c] sm:$0xf]
    %v61 = vld [vmem:[%s2 + $0x40] sm:$0xf]
    %v62 = vld [vmem:[%s2 + $0x44] sm:$0xf]
    %v63 = vld [vmem:[%s2 + $0x48] sm:$0xf]
    %v64 = vld [vmem:[%s2 + $0x4c] sm:$0xf]
    %v65 = vld [vmem:[%s2 + $0x50] sm:$0xf]
    %v66 = vld [vmem:[%s2 + $0x54] sm:$0xf]
    %v67 = vld [vmem:[%s2 + $0x58] sm:$0xf]
    %v68 = vld [vmem:[%s2 + $0x5c] sm:$0xf]
    %v69 = vld [vmem:[%s2 + $0x60] sm:$0xf]
    %v70 = vld [vmem:[%s2 + $0x64] sm:$0xf]
    %v71 = vld [vmem:[%s2 + $0x68] sm:$0xf]
    %v72 = vld [vmem:[%s2 + $0x6c] sm:$0xf]
    %v73 = vld [vmem:[%s2 + $0x70] sm:$0xf]
    %v74 = vld [vmem:[%s2 + $0x74] sm:$0xf]
    %v75 = vld [vmem:[%s2 + $0x78] sm:$0xf]
    %v76 = vld [vmem:[%s2 + $0x7c] sm:$0xf]
    %v77 = vlaneseq
    %v78 = vshrl.u32 %v77, 7
    %v79 = vsub.s32 0, %v78
    %v80 = vrot.slane %v44, %v79
    %v83 = vunpack.c.l.s4 1966171168
    %v84 = vunpack.c.0.s8 %v83
    %v85 = vlaneseq
    %v86 = vshrl.u32 %v85, 7
    %v87 = vsub.s32 %v84, %v86
    %v88 = vrot.slane %v43, %v87
    %v89 = vcombine.high %v88, %v88
    %v91 = vunpack.c.l.s4 1966171168
    %v92 = vunpack.c.0.s8 %v91
    %v93 = vlaneseq
    %v94 = vshrl.u32 %v93, 7
    %v95 = vsub.s32 %v92, %v94
    %v96 = vrot.slane %v88, %v95
    %v98 = vunpack.c.l.s4 1966171168
    %v99 = vunpack.c.0.s8 %v98
    %v100 = vlaneseq
    %v101 = vshrl.u32 %v100, 7
    %v102 = vsub.s32 %v99, %v101
    %v103 = vrot.slane %v89, %v102
    %v138 = vunpack.c.l.b16 %v45
    %v139 = vunpack.c.l.b16 %v46
    %v140 = vunpack.c.l.b16 %v47
    %v141 = vunpack.c.l.b16 %v48
    %v142 = vunpack.c.l.b16 %v49
    %v143 = vunpack.c.l.b16 %v50
    %v144 = vunpack.c.l.b16 %v51
    %v145 = vunpack.c.l.b16 %v52
    %v146 = vunpack.c.l.b16 %v53
    %v147 = vunpack.c.l.b16 %v54
    %v148 = vunpack.c.l.b16 %v55
    %v149 = vunpack.c.l.b16 %v56
    %v150 = vunpack.c.l.b16 %v57
    %v151 = vunpack.c.l.b16 %v58
    %v152 = vunpack.c.l.b16 %v59
    %v153 = vunpack.c.l.b16 %v60
    %v154 = vunpack.c.l.b16 %v61
    %v155 = vunpack.c.l.b16 %v62
    %v156 = vunpack.c.l.b16 %v63
    %v157 = vunpack.c.l.b16 %v64
    %v158 = vunpack.c.l.b16 %v65
    %v159 = vunpack.c.l.b16 %v66
    %v160 = vunpack.c.l.b16 %v67
    %v161 = vunpack.c.l.b16 %v68
    %v162 = vunpack.c.l.b16 %v69
    %v163 = vunpack.c.l.b16 %v70
    %v164 = vunpack.c.l.b16 %v71
    %v165 = vunpack.c.l.b16 %v72
    %v166 = vunpack.c.l.b16 %v73
    %v167 = vunpack.c.l.b16 %v74
    %v168 = vunpack.c.l.b16 %v75
    %v169 = vunpack.c.l.b16 %v76
    %v170 = vpack.c.b16 %v139, %v138
    %v171 = vpack.c.b16 %v141, %v140
    %v172 = vpack.c.b16 %v143, %v142
    %v173 = vpack.c.b16 %v145, %v144
    %v174 = vpack.c.b16 %v147, %v146
    %v175 = vpack.c.b16 %v149, %v148
    %v176 = vpack.c.b16 %v151, %v150
    %v177 = vpack.c.b16 %v153, %v152
    %v178 = vpack.c.b16 %v155, %v154
    %v179 = vpack.c.b16 %v157, %v156
    %v180 = vpack.c.b16 %v159, %v158
    %v181 = vpack.c.b16 %v161, %v160
    %v182 = vpack.c.b16 %v163, %v162
    %v183 = vpack.c.b16 %v165, %v164
    %v184 = vpack.c.b16 %v167, %v166
    %v185 = vpack.c.b16 %v169, %v168
    %202 = vmatprep.subr.bf16.mxu0 0
    %203 = vmatpush1.bf16.msra.mxu0 %v170
    %204 = vmatprep.subr.bf16.mxu0 0
    %205 = vmatpush1.bf16.msra.mxu0 %v171
    %206 = vmatprep.subr.bf16.mxu0 0
    %207 = vmatpush1.bf16.msra.mxu0 %v172
    %208 = vmatprep.subr.bf16.mxu0 0
    %209 = vmatpush1.bf16.msra.mxu0 %v173
    %210 = vmatprep.subr.bf16.mxu0 0
    %211 = vmatpush1.bf16.msra.mxu0 %v174
    %212 = vmatprep.subr.bf16.mxu0 0
    %213 = vmatpush1.bf16.msra.mxu0 %v175
    %214 = vmatprep.subr.bf16.mxu0 0
    %215 = vmatpush1.bf16.msra.mxu0 %v176
    %216 = vmatprep.subr.bf16.mxu0 0
    %217 = vmatpush1.bf16.msra.mxu0 %v177
    %218 = vmatprep.subr.bf16.mxu0 0
    %219 = vmatpush1.bf16.msra.mxu0 %v178
    %220 = vmatprep.subr.bf16.mxu0 0
    %221 = vmatpush1.bf16.msra.mxu0 %v179
    %222 = vmatprep.subr.bf16.mxu0 0
    %223 = vmatpush1.bf16.msra.mxu0 %v180
    %224 = vmatprep.subr.bf16.mxu0 0
    %225 = vmatpush1.bf16.msra.mxu0 %v181
    %226 = vmatprep.subr.bf16.mxu0 0
    %227 = vmatpush1.bf16.msra.mxu0 %v182
    %228 = vmatprep.subr.bf16.mxu0 0
    %229 = vmatpush1.bf16.msra.mxu0 %v183
    %230 = vmatprep.subr.bf16.mxu0 0
    %231 = vmatpush1.bf16.msra.mxu0 %v184
    %232 = vmatprep.subr.bf16.mxu0 0
    %233 = vmatpush1.bf16.msra.mxu0 %v185
    %234 = vmatprep.mubr.bf16.mxu0 %v103
    %235 = vmatmul.mubr.bf16.gmra.mrb[0].mxu0 %v96
    %v236 = vpop.f32.mrb[0].mxu0
    %v237 = vadd.f32 %v80, %v236
    %v238 = vpop.f32.mrb[0].mxu0
    %v239 = vpop.f32.mrb[0].mxu0
    %v240 = vpop.f32.mrb[0].mxu0
    %241 = vdwg.mxu0
    %vm242 = vcmask 517120
    %v243 = vsel %vm242, %v237, 0.0
    %244 = vadd.xlane.f32.xlu0 %v243
    %v245 = vpop.xlane.xlu0 %244
    %v246 = vrcp.pop 64.0
    %v247 = vmul.f32 %v245, %v246
    %v248 = vsub.f32 %v237, %v247
    %v249 = vmul.f32 %v248, %v248
    %v250 = vsel %vm242, %v249, 0.0
    %251 = vadd.xlane.f32.xlu0 %v250
    %v252 = vpop.xlane.xlu0 %251
    %v253 = vmul.f32 %v252, %v246
    %v254 = vadd.f32 %v253, 1e-05
    %v255 = vrsqrt.pop %v254
    %v256 = vmul.f32 %v248, %v255
    %v257 = vlaneseq
    %v258 = vshrl.u32 %v257, 7
    %v259 = vsub.s32 1, %v258
    %v260 = vrot.slane %v44, %v259
    %v261 = vmul.f32 %v256, %v260
    %v262 = vlaneseq
    %v263 = vshrl.u32 %v262, 7
    %v264 = vsub.s32 2, %v263
    %v265 = vrot.slane %v44, %v264
    %v266 = vadd.f32 %v261, %v265
    %v267 = vmul.f32 %v266, 0.2
    %v268 = vmax.f32 %v266, %v267
    %s269 = scalar_lea.vmem %s4, 4
    %v270 = vld [vmem:[%s269] sm:$0x7]
    %v271 = vpack.c.bf16 %v268, %v268
    %v272 = vld [vmem:[%s3] sm:$0xf]
    %v273 = vld [vmem:[%s3 + $0x4] sm:$0xf]
    %v274 = vld [vmem:[%s3 + $0x8] sm:$0xf]
    %v275 = vld [vmem:[%s3 + $0xc] sm:$0xf]
    %v276 = vld [vmem:[%s3 + $0x10] sm:$0xf]
    %v277 = vld [vmem:[%s3 + $0x14] sm:$0xf]
    %v278 = vld [vmem:[%s3 + $0x18] sm:$0xf]
    %v279 = vld [vmem:[%s3 + $0x1c] sm:$0xf]
    %v280 = vlaneseq
    %v281 = vshrl.u32 %v280, 7
    %v282 = vsub.s32 0, %v281
    %v283 = vrot.slane %v270, %v282
    %v292 = vunpack.c.l.b16 %v272
    %v293 = vunpack.c.l.b16 %v273
    %v294 = vunpack.c.l.b16 %v274
    %v295 = vunpack.c.l.b16 %v275
    %v296 = vunpack.c.l.b16 %v276
    %v297 = vunpack.c.l.b16 %v277
    %v298 = vunpack.c.l.b16 %v278
    %v299 = vunpack.c.l.b16 %v279
    %v300 = vpack.c.b16 %v293, %v292
    %v301 = vpack.c.b16 %v295, %v294
    %v302 = vpack.c.b16 %v297, %v296
    %v303 = vpack.c.b16 %v299, %v298
    %vm308 = vcmask 523264
    %v310 = vsel %vm308, %v271, 0
    %312 = vmatprep.subr.bf16.mxu0 0
    %313 = vmatpush1.bf16.msra.mxu0 %v300
    %314 = vmatprep.subr.bf16.mxu0 0
    %315 = vmatpush1.bf16.msra.mxu0 %v301
    %316 = vmatprep.subr.bf16.mxu0 0
    %317 = vmatpush1.bf16.msra.mxu0 %v302
    %318 = vmatprep.subr.bf16.mxu0 0
    %319 = vmatpush1.bf16.msra.mxu0 %v303
    %320 = vmatprep.subr.bf16.mxu0 0
    %321 = vmatpush1.bf16.msra.mxu0 0
    %322 = vmatprep.subr.bf16.mxu0 0
    %323 = vmatpush1.bf16.msra.mxu0 0
    %324 = vmatprep.subr.bf16.mxu0 0
    %325 = vmatpush1.bf16.msra.mxu0 0
    %326 = vmatprep.subr.bf16.mxu0 0
    %327 = vmatpush1.bf16.msra.mxu0 0
    %328 = vmatprep.subr.bf16.mxu0 0
    %329 = vmatpush1.bf16.msra.mxu0 0
    %330 = vmatprep.subr.bf16.mxu0 0
    %331 = vmatpush1.bf16.msra.mxu0 0
    %332 = vmatprep.subr.bf16.mxu0 0
    %333 = vmatpush1.bf16.msra.mxu0 0
    %334 = vmatprep.subr.bf16.mxu0 0
    %335 = vmatpush1.bf16.msra.mxu0 0
    %336 = vmatprep.subr.bf16.mxu0 0
    %337 = vmatpush1.bf16.msra.mxu0 0
    %338 = vmatprep.subr.bf16.mxu0 0
    %339 = vmatpush1.bf16.msra.mxu0 0
    %340 = vmatprep.subr.bf16.mxu0 0
    %341 = vmatpush1.bf16.msra.mxu0 0
    %342 = vmatprep.subr.bf16.mxu0 0
    %343 = vmatpush1.bf16.msra.mxu0 0
    %344 = vmatprep.mubr.bf16.mxu0 0
    %345 = vmatmul.mubr.bf16.gmra.mrb[0].mxu0 %v310
    %v346 = vpop.f32.mrb[0].mxu0
    %v347 = vadd.f32 %v283, %v346
    %v348 = vpop.f32.mrb[0].mxu0
    %v349 = vpop.f32.mrb[0].mxu0
    %v350 = vpop.f32.mrb[0].mxu0
    %351 = vdwg.mxu0
    %vm352 = vcmask 254976
    %v353 = vsel %vm352, %v347, 0.0
    %354 = vadd.xlane.f32.xlu0 %v353
    %v355 = vpop.xlane.xlu0 %354
    %v356 = vrcp.pop 32.0
    %v357 = vmul.f32 %v355, %v356
    %v358 = vsub.f32 %v347, %v357
    %v359 = vmul.f32 %v358, %v358
    %v360 = vsel %vm352, %v359, 0.0
    %361 = vadd.xlane.f32.xlu0 %v360
    %v362 = vpop.xlane.xlu0 %361
    %v363 = vmul.f32 %v362, %v356
    %v364 = vadd.f32 %v363, 1e-05
    %v365 = vrsqrt.pop %v364
    %v366 = vmul.f32 %v358, %v365
    %v367 = vlaneseq
    %v368 = vshrl.u32 %v367, 7
    %v369 = vsub.s32 1, %v368
    %v370 = vrot.slane %v270, %v369
    %v371 = vmul.f32 %v366, %v370
    %v372 = vlaneseq
    %v373 = vshrl.u32 %v372, 7
    %v374 = vsub.s32 2, %v373
    %v375 = vrot.slane %v270, %v374
    %v376 = vadd.f32 %v371, %v375
    %v377 = vmul.f32 %v376, 0.2
    %v378 = vmax.f32 %v376, %v377
    %v379 = vpack.c.bf16 %v378, %v378
    %v380 = vld [vmem:[%s5] sm:$0xf]
    %v381 = vld [vmem:[%s5 + $0x4] sm:$0xf]
    %v382 = vld [vmem:[%s5 + $0x8] sm:$0xf]
    %v383 = vld [vmem:[%s5 + $0xc] sm:$0xf]
    %v384 = vld [vmem:[%s6] sm:$0x1]
    %v386 = vlaneseq
    %v387 = vshrl.u32 %v386, 7
    %v388 = vsub.s32 0, %v387
    %v389 = vrot.slane %v384, %v388
    %v395 = vunpack.c.l.b16 %v380
    %v396 = vunpack.c.l.b16 %v381
    %v397 = vunpack.c.l.b16 %v382
    %v398 = vunpack.c.l.b16 %v383
    %v399 = vpack.c.b16 %v396, %v395
    %v400 = vpack.c.b16 %v398, %v397
    %vm403 = vcmask 261120
    %v405 = vsel %vm403, %v379, 0
    %407 = vmatprep.subr.bf16.mxu0 0
    %408 = vmatpush1.bf16.msra.mxu0 %v399
    %409 = vmatprep.subr.bf16.mxu0 0
    %410 = vmatpush1.bf16.msra.mxu0 %v400
    %411 = vmatprep.subr.bf16.mxu0 0
    %412 = vmatpush1.bf16.msra.mxu0 0
    %413 = vmatprep.subr.bf16.mxu0 0
    %414 = vmatpush1.bf16.msra.mxu0 0
    %415 = vmatprep.subr.bf16.mxu0 0
    %416 = vmatpush1.bf16.msra.mxu0 0
    %417 = vmatprep.subr.bf16.mxu0 0
    %418 = vmatpush1.bf16.msra.mxu0 0
    %419 = vmatprep.subr.bf16.mxu0 0
    %420 = vmatpush1.bf16.msra.mxu0 0
    %421 = vmatprep.subr.bf16.mxu0 0
    %422 = vmatpush1.bf16.msra.mxu0 0
    %423 = vmatprep.subr.bf16.mxu0 0
    %424 = vmatpush1.bf16.msra.mxu0 0
    %425 = vmatprep.subr.bf16.mxu0 0
    %426 = vmatpush1.bf16.msra.mxu0 0
    %427 = vmatprep.subr.bf16.mxu0 0
    %428 = vmatpush1.bf16.msra.mxu0 0
    %429 = vmatprep.subr.bf16.mxu0 0
    %430 = vmatpush1.bf16.msra.mxu0 0
    %431 = vmatprep.subr.bf16.mxu0 0
    %432 = vmatpush1.bf16.msra.mxu0 0
    %433 = vmatprep.subr.bf16.mxu0 0
    %434 = vmatpush1.bf16.msra.mxu0 0
    %435 = vmatprep.subr.bf16.mxu0 0
    %436 = vmatpush1.bf16.msra.mxu0 0
    %437 = vmatprep.subr.bf16.mxu0 0
    %438 = vmatpush1.bf16.msra.mxu0 0
    %439 = vmatprep.mubr.bf16.mxu0 0
    %440 = vmatmul.mubr.bf16.gmra.mrb[0].mxu0 %v405
    %v441 = vpop.f32.mrb[0].mxu0
    %v442 = vadd.f32 %v389, %v441
    %v443 = vpop.f32.mrb[0].mxu0
    %v444 = vpop.f32.mrb[0].mxu0
    %v445 = vpop.f32.mrb[0].mxu0
    %446 = vdwg.mxu0
    %447 = vst.msk [vmem:[#allocation4] sm:$0x3] %vm352, %v442
    %v448 = vmul.f32 %v442, 0.5
    %v449 = vmul.f32 %v448, 1.442695
    %v450 = vpow.pop %v449
    %v451 = vld [vmem:[%s1] sm:$0x3]
    %453 = vrot.lane.b32.xlu0 %v451, 16
    %v454 = vpop.permute.xlu0 %453
    %v456 = vmul.f32 %v450, %v454
    %458 = vrot.lane.b32.xlu0 %v456, 112
    %v459 = vpop.permute.xlu0 %458
    %v461 = vadd.f32 %v442, %v459
    %v462 = vld [vmem:[%s10] sm:$0x77]
    %v463 = vpack.c.bf16 %v461, %v461
    %v464 = vld [vmem:[%s7] sm:$0xf]
    %v465 = vld [vmem:[%s7 + $0x4] sm:$0xf]
    %v466 = vlaneseq
    %v467 = vshrl.u32 %v466, 7
    %v468 = vsub.s32 0, %v467
    %v469 = vrot.slane %v462, %v468
    %v472 = vunpack.c.l.b16 %v464
    %v473 = vunpack.c.l.b16 %v465
    %v474 = vpack.c.b16 %v473, %v472
    %vm476 = vcmask 130048
    %v478 = vsel %vm476, %v463, 0
    %480 = vmatprep.subr.bf16.mxu0 0
    %481 = vmatpush1.bf16.msra.mxu0 %v474
    %482 = vmatprep.subr.bf16.mxu0 0
    %483 = vmatpush1.bf16.msra.mxu0 0
    %484 = vmatprep.subr.bf16.mxu0 0
    %485 = vmatpush1.bf16.msra.mxu0 0
    %486 = vmatprep.subr.bf16.mxu0 0
    %487 = vmatpush1.bf16.msra.mxu0 0
    %488 = vmatprep.subr.bf16.mxu0 0
    %489 = vmatpush1.bf16.msra.mxu0 0
    %490 = vmatprep.subr.bf16.mxu0 0
    %491 = vmatpush1.bf16.msra.mxu0 0
    %492 = vmatprep.subr.bf16.mxu0 0
    %493 = vmatpush1.bf16.msra.mxu0 0
    %494 = vmatprep.subr.bf16.mxu0 0
    %495 = vmatpush1.bf16.msra.mxu0 0
    %496 = vmatprep.subr.bf16.mxu0 0
    %497 = vmatpush1.bf16.msra.mxu0 0
    %498 = vmatprep.subr.bf16.mxu0 0
    %499 = vmatpush1.bf16.msra.mxu0 0
    %500 = vmatprep.subr.bf16.mxu0 0
    %501 = vmatpush1.bf16.msra.mxu0 0
    %502 = vmatprep.subr.bf16.mxu0 0
    %503 = vmatpush1.bf16.msra.mxu0 0
    %504 = vmatprep.subr.bf16.mxu0 0
    %505 = vmatpush1.bf16.msra.mxu0 0
    %506 = vmatprep.subr.bf16.mxu0 0
    %507 = vmatpush1.bf16.msra.mxu0 0
    %508 = vmatprep.subr.bf16.mxu0 0
    %509 = vmatpush1.bf16.msra.mxu0 0
    %510 = vmatprep.subr.bf16.mxu0 0
    %511 = vmatpush1.bf16.msra.mxu0 0
    %512 = vmatprep.mubr.bf16.mxu0 0
    %513 = vmatmul.mubr.bf16.gmra.mrb[0].mxu0 %v478
    %v514 = vpop.f32.mrb[0].mxu0
    %v515 = vadd.f32 %v469, %v514
    %v516 = vpop.f32.mrb[0].mxu0
    %v517 = vpop.f32.mrb[0].mxu0
    %v518 = vpop.f32.mrb[0].mxu0
    %519 = vdwg.mxu0
    %v520 = vsel %vm352, %v515, 0.0
    %521 = vadd.xlane.f32.xlu0 %v520
    %v522 = vpop.xlane.xlu0 %521
    %v523 = vmul.f32 %v522, %v356
    %v524 = vsub.f32 %v515, %v523
    %v525 = vmul.f32 %v524, %v524
    %v526 = vsel %vm352, %v525, 0.0
    %527 = vadd.xlane.f32.xlu0 %v526
    %v528 = vpop.xlane.xlu0 %527
    %v529 = vmul.f32 %v528, %v356
    %v530 = vadd.f32 %v529, 1e-05
    %v531 = vrsqrt.pop %v530
    %v532 = vmul.f32 %v524, %v531
    %v533 = vlaneseq
    %v534 = vshrl.u32 %v533, 7
    %v535 = vsub.s32 1, %v534
    %v536 = vrot.slane %v462, %v535
    %v537 = vmul.f32 %v532, %v536
    %v538 = vlaneseq
    %v539 = vshrl.u32 %v538, 7
    %v540 = vsub.s32 2, %v539
    %v541 = vrot.slane %v462, %v540
    %v542 = vadd.f32 %v537, %v541
    %v543 = vmul.f32 %v542, 0.2
    %v544 = vmax.f32 %v542, %v543
    %s545 = scalar_lea.vmem %s10, 8
    %v546 = vld [vmem:[%s545] sm:$0x77]
    %v547 = vpack.c.bf16 %v544, %v544
    %v548 = vld [vmem:[%s8] sm:$0xf]
    %v549 = vld [vmem:[%s8 + $0x4] sm:$0xf]
    %v550 = vld [vmem:[%s8 + $0x8] sm:$0xf]
    %v551 = vld [vmem:[%s8 + $0xc] sm:$0xf]
    %v552 = vlaneseq
    %v553 = vshrl.u32 %v552, 7
    %v554 = vsub.s32 0, %v553
    %v555 = vrot.slane %v546, %v554
    %v560 = vunpack.c.l.b16 %v548
    %v561 = vunpack.c.l.b16 %v549
    %v562 = vunpack.c.l.b16 %v550
    %v563 = vunpack.c.l.b16 %v551
    %v564 = vpack.c.b16 %v561, %v560
    %v565 = vpack.c.b16 %v563, %v562
    %v569 = vsel %vm403, %v547, 0
    %571 = vmatprep.subr.bf16.mxu0 0
    %572 = vmatpush1.bf16.msra.mxu0 %v564
    %573 = vmatprep.subr.bf16.mxu0 0
    %574 = vmatpush1.bf16.msra.mxu0 %v565
    %575 = vmatprep.subr.bf16.mxu0 0
    %576 = vmatpush1.bf16.msra.mxu0 0
    %577 = vmatprep.subr.bf16.mxu0 0
    %578 = vmatpush1.bf16.msra.mxu0 0
    %579 = vmatprep.subr.bf16.mxu0 0
    %580 = vmatpush1.bf16.msra.mxu0 0
    %581 = vmatprep.subr.bf16.mxu0 0
    %582 = vmatpush1.bf16.msra.mxu0 0
    %583 = vmatprep.subr.bf16.mxu0 0
    %584 = vmatpush1.bf16.msra.mxu0 0
    %585 = vmatprep.subr.bf16.mxu0 0
    %586 = vmatpush1.bf16.msra.mxu0 0
    %587 = vmatprep.subr.bf16.mxu0 0
    %588 = vmatpush1.bf16.msra.mxu0 0
    %589 = vmatprep.subr.bf16.mxu0 0
    %590 = vmatpush1.bf16.msra.mxu0 0
    %591 = vmatprep.subr.bf16.mxu0 0
    %592 = vmatpush1.bf16.msra.mxu0 0
    %593 = vmatprep.subr.bf16.mxu0 0
    %594 = vmatpush1.bf16.msra.mxu0 0
    %595 = vmatprep.subr.bf16.mxu0 0
    %596 = vmatpush1.bf16.msra.mxu0 0
    %597 = vmatprep.subr.bf16.mxu0 0
    %598 = vmatpush1.bf16.msra.mxu0 0
    %599 = vmatprep.subr.bf16.mxu0 0
    %600 = vmatpush1.bf16.msra.mxu0 0
    %601 = vmatprep.subr.bf16.mxu0 0
    %602 = vmatpush1.bf16.msra.mxu0 0
    %603 = vmatprep.mubr.bf16.mxu0 0
    %604 = vmatmul.mubr.bf16.gmra.mrb[0].mxu0 %v569
    %v605 = vpop.f32.mrb[0].mxu0
    %v606 = vadd.f32 %v555, %v605
    %v607 = vpop.f32.mrb[0].mxu0
    %v608 = vpop.f32.mrb[0].mxu0
    %v609 = vpop.f32.mrb[0].mxu0
    %610 = vdwg.mxu0
    %v611 = vsel %vm242, %v606, 0.0
    %612 = vadd.xlane.f32.xlu0 %v611
    %v613 = vpop.xlane.xlu0 %612
    %v614 = vmul.f32 %v613, %v246
    %v615 = vsub.f32 %v606, %v614
    %v616 = vmul.f32 %v615, %v615
    %v617 = vsel %vm242, %v616, 0.0
    %618 = vadd.xlane.f32.xlu0 %v617
    %v619 = vpop.xlane.xlu0 %618
    %v620 = vmul.f32 %v619, %v246
    %v621 = vadd.f32 %v620, 1e-05
    %v622 = vrsqrt.pop %v621
    %v623 = vmul.f32 %v615, %v622
    %v624 = vlaneseq
    %v625 = vshrl.u32 %v624, 7
    %v626 = vsub.s32 1, %v625
    %v627 = vrot.slane %v546, %v626
    %v628 = vmul.f32 %v623, %v627
    %v629 = vlaneseq
    %v630 = vshrl.u32 %v629, 7
    %v631 = vsub.s32 2, %v630
    %v632 = vrot.slane %v546, %v631
    %v633 = vadd.f32 %v628, %v632
    %v634 = vmul.f32 %v633, 0.2
    %v635 = vmax.f32 %v633, %v634
    %s636 = scalar_lea.vmem %s10, 16
    %v637 = vld [vmem:[%s636] sm:$0x77]
    %v638 = vpack.c.bf16 %v635, %v635
    %v639 = vld [vmem:[%s9] sm:$0xff]
    %v640 = vld [vmem:[%s9 + $0x8] sm:$0xff]
    %v641 = vld [vmem:[%s9 + $0x10] sm:$0xff]
    %v642 = vld [vmem:[%s9 + $0x18] sm:$0xff]
    %v643 = vld [vmem:[%s9 + $0x20] sm:$0xff]
    %v644 = vld [vmem:[%s9 + $0x28] sm:$0xff]
    %v645 = vld [vmem:[%s9 + $0x30] sm:$0xff]
    %v646 = vld [vmem:[%s9 + $0x38] sm:$0xff]
    %v648 = vlaneseq
    %v649 = vshrl.u32 %v648, 7
    %v650 = vsub.s32 0, %v649
    %v651 = vrot.slane %v637, %v650
    %v652 = vlaneseq
    %v653 = vshrl.u32 %v652, 7
    %v654 = vsub.s32 4, %v653
    %v655 = vrot.slane %v637, %v654
    %v658 = vlaneseq
    %v659 = vshrl.u32 %v658, 7
    %v660 = vsub.s32 0, %v659
    %v661 = vrot.slane %v651, %v660
    %v662 = vlaneseq
    %v663 = vshrl.u32 %v662, 7
    %v664 = vsub.s32 0, %v663
    %v665 = vrot.slane %v655, %v664
    %v674 = vunpack.c.l.b16 %v639
    %v675 = vunpack.c.h.b16 %v639
    %v676 = vunpack.c.l.b16 %v640
    %v677 = vunpack.c.h.b16 %v640
    %v678 = vunpack.c.l.b16 %v641
    %v679 = vunpack.c.h.b16 %v641
    %v680 = vunpack.c.l.b16 %v642
    %v681 = vunpack.c.h.b16 %v642
    %v682 = vunpack.c.l.b16 %v643
    %v683 = vunpack.c.h.b16 %v643
    %v684 = vunpack.c.l.b16 %v644
    %v685 = vunpack.c.h.b16 %v644
    %v686 = vunpack.c.l.b16 %v645
    %v687 = vunpack.c.h.b16 %v645
    %v688 = vunpack.c.l.b16 %v646
    %v689 = vunpack.c.h.b16 %v646
    %v690 = vpack.c.b16 %v676, %v674
    %v691 = vpack.c.b16 %v677, %v675
    %v692 = vpack.c.b16 %v680, %v678
    %v693 = vpack.c.b16 %v681, %v679
    %v694 = vpack.c.b16 %v684, %v682
    %v695 = vpack.c.b16 %v685, %v683
    %v696 = vpack.c.b16 %v688, %v686
    %v697 = vpack.c.b16 %v689, %v687
    %v707 = vsel %vm308, %v638, 0
    %709 = vmatprep.subr.bf16.mxu0 %v691
    %710 = vmatpush1.bf16.msra.mxu0 %v690
    %711 = vmatprep.subr.bf16.mxu0 %v693
    %712 = vmatpush1.bf16.msra.mxu0 %v692
    %713 = vmatprep.subr.bf16.mxu0 %v695
    %714 = vmatpush1.bf16.msra.mxu0 %v694
    %715 = vmatprep.subr.bf16.mxu0 %v697
    %716 = vmatpush1.bf16.msra.mxu0 %v696
    %717 = vmatprep.subr.bf16.mxu0 0
    %718 = vmatpush1.bf16.msra.mxu0 0
    %719 = vmatprep.subr.bf16.mxu0 0
    %720 = vmatpush1.bf16.msra.mxu0 0
    %721 = vmatprep.subr.bf16.mxu0 0
    %722 = vmatpush1.bf16.msra.mxu0 0
    %723 = vmatprep.subr.bf16.mxu0 0
    %724 = vmatpush1.bf16.msra.mxu0 0
    %725 = vmatprep.subr.bf16.mxu0 0
    %726 = vmatpush1.bf16.msra.mxu0 0
    %727 = vmatprep.subr.bf16.mxu0 0
    %728 = vmatpush1.bf16.msra.mxu0 0
    %729 = vmatprep.subr.bf16.mxu0 0
    %730 = vmatpush1.bf16.msra.mxu0 0
    %731 = vmatprep.subr.bf16.mxu0 0
    %732 = vmatpush1.bf16.msra.mxu0 0
    %733 = vmatprep.subr.bf16.mxu0 0
    %734 = vmatpush1.bf16.msra.mxu0 0
    %735 = vmatprep.subr.bf16.mxu0 0
    %736 = vmatpush1.bf16.msra.mxu0 0
    %737 = vmatprep.subr.bf16.mxu0 0
    %738 = vmatpush1.bf16.msra.mxu0 0
    %739 = vmatprep.subr.bf16.mxu0 0
    %740 = vmatpush1.bf16.msra.mxu0 0
    %741 = vmatprep.mubr.bf16.mxu0 0
    %742 = vmatmul.mubr.bf16.gmra.mrb[0].mxu0 %v707
    %v743 = vpop.f32.mrb[0].mxu0
    %v744 = vadd.f32 %v661, %v743
    %v745 = vpop.f32.mrb[0].mxu0
    %v746 = vadd.f32 %v665, %v745
    %v747 = vpop.f32.mrb[0].mxu0
    %v748 = vpop.f32.mrb[0].mxu0
    %749 = vdwg.mxu0
    %vm750 = vcmask 1041408
    %v751 = vsel %vm750, %v744, 0.0
    %v752 = vsel %vm750, %v746, 0.0
    %v753 = vadd.f32 %v751, %v752
    %754 = vadd.xlane.f32.xlu0 %v753
    %v755 = vpop.xlane.xlu0 %754
    %v756 = vrcp.pop 256.0
    %v757 = vmul.f32 %v755, %v756
    %v758 = vsub.f32 %v744, %v757
    %v759 = vsub.f32 %v746, %v757
    %v760 = vmul.f32 %v758, %v758
    %v761 = vmul.f32 %v759, %v759
    %v762 = vsel %vm750, %v760, 0.0
    %v763 = vsel %vm750, %v761, 0.0
    %v764 = vadd.f32 %v762, %v763
    %765 = vadd.xlane.f32.xlu0 %v764
    %v766 = vpop.xlane.xlu0 %765
    %v767 = vmul.f32 %v766, %v756
    %v768 = vadd.f32 %v767, 1e-05
    %v769 = vrsqrt.pop %v768
    %v770 = vmul.f32 %v758, %v769
    %v771 = vmul.f32 %v759, %v769
    %v772 = vlaneseq
    %v773 = vshrl.u32 %v772, 7
    %v774 = vsub.s32 1, %v773
    %v775 = vrot.slane %v637, %v774
    %v776 = vlaneseq
    %v777 = vshrl.u32 %v776, 7
    %v778 = vsub.s32 5, %v777
    %v779 = vrot.slane %v637, %v778
    %v782 = vlaneseq
    %v783 = vshrl.u32 %v782, 7
    %v784 = vsub.s32 1, %v783
    %v785 = vrot.slane %v775, %v784
    %v786 = vlaneseq
    %v787 = vshrl.u32 %v786, 7
    %v788 = vsub.s32 1, %v787
    %v789 = vrot.slane %v779, %v788
    %v790 = vmul.f32 %v770, %v785
    %v791 = vmul.f32 %v771, %v789
    %v792 = vlaneseq
    %v793 = vshrl.u32 %v792, 7
    %v794 = vsub.s32 2, %v793
    %v795 = vrot.slane %v637, %v794
    %v796 = vlaneseq
    %v797 = vshrl.u32 %v796, 7
    %v798 = vsub.s32 6, %v797
    %v799 = vrot.slane %v637, %v798
    %v802 = vlaneseq
    %v803 = vshrl.u32 %v802, 7
    %v804 = vsub.s32 2, %v803
    %v805 = vrot.slane %v795, %v804
    %v806 = vlaneseq
    %v807 = vshrl.u32 %v806, 7
    %v808 = vsub.s32 2, %v807
    %v809 = vrot.slane %v799, %v808
    %v810 = vadd.f32 %v790, %v805
    %v811 = vadd.f32 %v791, %v809
    %v812 = vmul.f32 %v810, 0.2
    %v813 = vmul.f32 %v811, 0.2
    %v814 = vmax.f32 %v810, %v812
    %v815 = vmax.f32 %v811, %v813
    %v816 = vpack.c.bf16 %v814, %v814
    %v817 = vpack.c.bf16 %v815, %v815
    %v820 = vcombine.low %v816, %v817
    %v822 = vunpack.c.l.s4 1966171168
    %v823 = vunpack.c.0.s8 %v822
    %v824 = vlaneseq
    %v825 = vshrl.u32 %v824, 7
    %v826 = vsub.s32 %v823, %v825
    %v827 = vrot.slane %v820, %v826
    %v829 = vunpack.c.l.s4 1966171168
    %v830 = vunpack.c.0.s8 %v829
    %v831 = vlaneseq
    %v832 = vshrl.u32 %v831, 7
    %v833 = vsub.s32 %v830, %v832
    %v834 = vrot.slane %v827, %v833
    %836 = vst [vmem:[#allocation2] sm:$0x3] %v834
    // Predicated region
    $region46: #{tpu_custom_call.1} parent=1 // pred_check
      _
    $region47: #{tpu_custom_call.1} parent=1 // pred_check_branch
      %838 = sbr.rel (0) target = $region49
    $region48: #{tpu_custom_call.1} parent=1 // pred_region
      %s840 = ssub.s32 32, 32
      %841 = vsyncadd [#allocation3], %s840
      %s843 = sshll.u32 [#allocation2], 4
      %s844 = int_to_ptr.vmem [resolvable:$true] %s843
      %846 = dma.vmem_to_hbm [thread:$0]  %s844, 32, %s11, [#allocation3]
    $region49: #{tpu_custom_call.1} parent=1 // pred_fallthru
      _
    // Predicated region
    $region50: #{tpu_custom_call.1} parent=1 // pred_check
      _
    $region51: #{tpu_custom_call.1} parent=1 // pred_check_branch
      %848 = sbr.rel (0) target = $region53
    $region52: #{tpu_custom_call.1} parent=1 // pred_region
      %s850 = ssub.s32 32, 32
      %851 = vsyncadd [#allocation5], %s850
      %s853 = sshll.u32 [#allocation4], 4
      %s854 = int_to_ptr.vmem [resolvable:$true] %s853
      %856 = dma.vmem_to_hbm [thread:$0]  %s854, 32, %s12, [#allocation5]
    $region53: #{tpu_custom_call.1} parent=1 // pred_fallthru
      _
    // Predicated region
    $region54: #{tpu_custom_call.1} parent=1 // pred_check
      _
    $region55: #{tpu_custom_call.1} parent=1 // pred_check_branch
      %858 = sbr.rel (0) target = $region57
    $region56: #{tpu_custom_call.1} parent=1 // pred_region
      %859 = dma.done [#allocation3], 32
    $region57: #{tpu_custom_call.1} parent=1 // pred_fallthru
      _
    // Predicated region
    $region58: #{tpu_custom_call.1} parent=1 // pred_check
      _
    $region59: #{tpu_custom_call.1} parent=1 // pred_check_branch
      %861 = sbr.rel (0) target = $region61
    $region60: #{tpu_custom_call.1} parent=1 // pred_region
      %862 = dma.done [#allocation5], 32
    $region61: #{tpu_custom_call.1} parent=1 // pred_fallthru
      _
    %863 = vsyncpa [#allocation3], 1
    %864 = vsyncpa [#allocation5], 1

</llo_original>
